<compile_context>
chip_gen: v7x
topology: tpu7x:2x2x1
jax: 0.10.0
libtpu: 0.0.40
codegen_flags: <defaults>
</compile_context>

<pallas_src>
import jax
import jax.numpy as jnp
from jax.experimental import pallas as pl
from jax.experimental.pallas import tpu as pltpu

LANE = 128
SUBLANE_BF16 = 16


def _round_up(x, m):
    return ((x + m - 1) // m) * m


def _pad2(a, rows, cols):
    return jnp.pad(a, ((0, rows - a.shape[0]), (0, cols - a.shape[1])))


def _make_dlgn_kernel(num_hidden_layers):
    """Kernel over one batch tile.

    refs = x, wg0, bg0, vrow0, [wg_i, bg_i, wv_i, bv_i for i >= 1], wout, bout, out
    Weight matrices are bf16; biases / vrow0 are f32 (beta already folded where
    needed: wg0/bg0 are scaled by beta, deeper gate biases are beta*bg_i).
    """
    assert num_hidden_layers >= 1

    def kernel(*refs):
        x_ref = refs[0]
        out_ref = refs[-1]
        p = refs[1:-1]

        # ---- Layer 0 (fused gate + value) ----------------------------------
        # h = beta * g0 ; gate = sigmoid(h).  MXU in bf16, accumulate in f32.
        h = jnp.dot(x_ref[...], p[0][...],
                    preferred_element_type=jnp.float32) + p[1][...]
        gate = jax.nn.sigmoid(h)
        # value layer 0: ones(B, D) @ Wv0 + bv0 precomputed in the wrapper.
        v = p[2][...] * gate

        # ---- Remaining hidden layers (fused gate + value per layer) --------
        idx = 3
        for _ in range(1, num_hidden_layers):
            wg, bg, wv, bv = p[idx], p[idx + 1], p[idx + 2], p[idx + 3]
            idx += 4
            # h_i = h_{i-1} @ Wg_i + beta*bg_i  (exact beta propagation)
            h = jnp.dot(h.astype(jnp.bfloat16), wg[...],
                        preferred_element_type=jnp.float32) + bg[...]
            gate = jax.nn.sigmoid(h)
            v = (jnp.dot(v.astype(jnp.bfloat16), wv[...],
                         preferred_element_type=jnp.float32) + bv[...]) * gate

        # ---- Output layer (lane-dense, 128-padded columns) -----------------
        wout, bout = p[idx], p[idx + 1]
        out_ref[...] = jnp.dot(v.astype(jnp.bfloat16), wout[...],
                               preferred_element_type=jnp.float32) + bout[...]

    return kernel


def prepare_dlgn_params(gate_params, value_params, out_params, beta=4.0):
    """One-time parameter preparation (hoisted out of the per-call forward).

    gate_params / value_params: list of (W (in,out), b (out,) or (1,out)) per
    hidden layer.  out_params: (W (last_hidden, num_classes), b).
    Returns (flat_params, meta): padded/bf16 arrays for the kernel + geometry.
    """
    num_hidden = len(gate_params)
    assert num_hidden >= 1 and len(value_params) == num_hidden

    D = gate_params[0][0].shape[0]
    num_classes = out_params[0].shape[1]
    D_pad = _round_up(D, LANE)
    C_pad = _round_up(num_classes, LANE)

    flat = []
    widths_pad = []
    prev_pad = D_pad
    for i, ((wg, bg), (wv, bv)) in enumerate(zip(gate_params, value_params)):
        wg = jnp.asarray(wg, jnp.float32)
        bg = jnp.asarray(bg, jnp.float32).reshape(1, -1)
        wv = jnp.asarray(wv, jnp.float32)
        bv = jnp.asarray(bv, jnp.float32).reshape(1, -1)
        n = wg.shape[1]
        n_pad = _round_up(n, LANE)
        widths_pad.append(n_pad)
        if i == 0:
            # h0 = x @ (beta*Wg0) + beta*bg0
            flat.append(_pad2((beta * wg).astype(jnp.bfloat16), prev_pad, n_pad))
            flat.append(_pad2(beta * bg, 1, n_pad))
            # value layer 0: ones(B, D) @ Wv0 + bv0 is batch independent (f32).
            vrow = jnp.sum(wv, axis=0, keepdims=True) + bv
            flat.append(_pad2(vrow, 1, n_pad))
        else:
            # h_i = h_{i-1} @ Wg_i + beta*bg_i  (weights NOT scaled)
            flat.append(_pad2(wg.astype(jnp.bfloat16), prev_pad, n_pad))
            flat.append(_pad2(beta * bg, 1, n_pad))
            flat.append(_pad2(wv.astype(jnp.bfloat16), prev_pad, n_pad))
            flat.append(_pad2(bv, 1, n_pad))
        prev_pad = n_pad

    wout = jnp.asarray(out_params[0], jnp.float32)
    bout = jnp.asarray(out_params[1], jnp.float32).reshape(1, -1)
    flat.append(_pad2(wout.astype(jnp.bfloat16), prev_pad, C_pad))
    flat.append(_pad2(bout, 1, C_pad))

    meta = dict(num_hidden=num_hidden, D=D, D_pad=D_pad,
                num_classes=num_classes, C_pad=C_pad,
                widths_pad=tuple(widths_pad))
    return flat, meta


def _pick_tile_b(B):
    if B <= SUBLANE_BF16:
        return _round_up(max(B, 1), SUBLANE_BF16)        # tiny batch: one tile
    if B <= 1024:
        # >= 2 grid steps so both v7x TensorCores get work on the parallel axis.
        return _round_up((B + 1) // 2, SUBLANE_BF16)
    return 512                                           # large B: amortize overhead


def dlgn_fc_forward(x, flat_params, meta):
    """x: (B, *input_size_list). Returns (B, num_classes) float32."""
    B = x.shape[0]
    x_flat = x.reshape(B, -1)
    D, D_pad = meta["D"], meta["D_pad"]
    C, C_pad = meta["num_classes"], meta["C_pad"]
    num_hidden = meta["num_hidden"]
    widths_pad = meta["widths_pad"]
    assert x_flat.shape[1] == D

    TILE_B = _pick_tile_b(B)
    B_pad = _round_up(B, TILE_B)
    grid = (B_pad // TILE_B,)

    # Cast once to bf16 (MXU operand dtype); pad only if actually needed.
    x_p = x_flat.astype(jnp.bfloat16)
    if B_pad != B or D_pad != D:
        x_p = jnp.pad(x_p, ((0, B_pad - B), (0, D_pad - D)))

    # ---- BlockSpecs: batch-tiled x/out, single-buffered resident weights ----
    const_map = lambda i: (0, 0)  # noqa: E731  (weights resident across batch tiles)
    in_specs = [pl.BlockSpec((TILE_B, D_pad), lambda i: (i, 0))]
    for a in flat_params:
        in_specs.append(
            pl.BlockSpec(a.shape, const_map, pipeline_mode=pl.Buffered(1)))
    out_specs = pl.BlockSpec((TILE_B, C_pad), lambda i: (i, 0))

    # ---- VMEM budget from actual shapes (v7x has only 64 MiB) ---------------
    weight_bytes = sum(int(a.size) * a.dtype.itemsize for a in flat_params)
    xtile_bytes = 2 * TILE_B * D_pad * 2            # bf16, double-buffered
    otile_bytes = 2 * TILE_B * C_pad * 4            # f32, double-buffered
    act_bytes = 4 * TILE_B * max(widths_pad) * 4    # h, gate, v, dot result (f32)
    needed = weight_bytes + xtile_bytes + otile_bytes + act_bytes
    try:
        vmem_cap = int(pltpu.get_tpu_info().vmem_capacity_bytes)
    except Exception:  # interpret mode / non-TPU emulation
        vmem_cap = 64 * 1024 * 1024
    vmem_limit = min(vmem_cap * 3 // 4, max(needed * 3 // 2, 32 << 20))
    # TODO(synk): if weight_bytes ever approaches ~75% of VMEM (very wide nets on
    # v7x), fall back to streaming weights over an extra "arbitrary" grid axis
    # instead of keeping every layer resident.

    # ---- cost estimate for XLA scheduling around the custom call ------------
    flops = 2 * B_pad * D_pad * widths_pad[0]
    prev = widths_pad[0]
    for w in widths_pad[1:]:
        flops += 2 * 2 * B_pad * prev * w           # gate + value matmuls
        prev = w
    flops += 2 * B_pad * prev * C_pad
    cost = pl.CostEstimate(
        flops=int(flops),
        transcendentals=int(B_pad * sum(widths_pad)),
        bytes_accessed=int(x_p.size) * 2 + weight_bytes + B_pad * C_pad * 4,
    )

    kernel = _make_dlgn_kernel(num_hidden)
    out_p = pl.pallas_call(
        kernel,
        out_shape=jax.ShapeDtypeStruct((B_pad, C_pad), jnp.float32),
        grid_spec=pltpu.PrefetchScalarGridSpec(
            num_scalar_prefetch=0,
            grid=grid,
            in_specs=in_specs,
            out_specs=out_specs,
        ),
        compiler_params=pltpu.CompilerParams(
            dimension_semantics=("parallel",),
            vmem_limit_bytes=int(vmem_limit),
        ),
        cost_estimate=cost,
    )(x_p, *flat_params)

    # Slice off batch padding and the lane-padding of num_classes.
    return out_p[:B, :C]


def _init_linear(key, fan_in, fan_out):
    """Deterministic init mimicking nn.Linear's U(-1/sqrt(fan_in), 1/sqrt(fan_in))."""
    kw, kb = jax.random.split(key)
    bound = 1.0 / (fan_in ** 0.5)
    w = jax.random.uniform(kw, (fan_in, fan_out), jnp.float32, -bound, bound)
    b = jax.random.uniform(kb, (1, fan_out), jnp.float32, -bound, bound)
    return w, b


def _reference_forward(x, gate_params, value_params, out_params, beta=4.0):
    """Pure-JAX f32 reference mirroring the PyTorch module."""
    B = x.shape[0]
    xf = x.reshape(B, -1)
    g = xf
    gates = []
    for wg, bg in gate_params:
        g = g @ wg + bg
        gates.append(jax.nn.sigmoid(beta * g))
    v = jnp.ones_like(xf)
    for (wv, bv), gate in zip(value_params, gates):
        v = (v @ wv + bv) * gate
    wout, bout = out_params
    return v @ wout + bout


if __name__ == "__main__":
    key = jax.random.PRNGKey(0)

    # Small shapes consistent with the module's defaults.
    batch = 2
    input_size_list = [16, 16]          # flattened input size = 256
    nodes_in_each_layer_list = [128, 64]
    num_classes = 10
    beta = 4.0

    input_size = 1
    for d in input_size_list:
        input_size *= d

    keys = jax.random.split(key, 2 * len(nodes_in_each_layer_list) + 2)
    gate_params, value_params = [], []
    prev = input_size
    ki = 0
    for n in nodes_in_each_layer_list:
        gate_params.append(_init_linear(keys[ki], prev, n)); ki += 1
        value_params.append(_init_linear(keys[ki], prev, n)); ki += 1
        prev = n
    out_params = _init_linear(keys[ki], prev, num_classes); ki += 1

    x = jax.random.normal(keys[ki], (batch, *input_size_list), jnp.float32)

    # One-time parameter prep (padding / beta folding / bf16 cast), then forward.
    flat_params, meta = prepare_dlgn_params(
        gate_params, value_params, out_params, beta=beta)
    out = dlgn_fc_forward(x, flat_params, meta)
    out = jax.block_until_ready(out)

    ref = _reference_forward(x, gate_params, value_params, out_params, beta=beta)
    assert out.shape == (batch, num_classes)
    # Matmul operands are bf16 (MXU-native); accumulation is f32 — the tolerance
    # reflects bf16 operand quantization only (semantic bugs would be O(1) off).
    assert jnp.allclose(out, ref, atol=3e-2, rtol=3e-2), (
        "Pallas output mismatch vs reference: "
        f"max abs err {float(jnp.max(jnp.abs(out - ref)))}")

    # TODO(synk): standardize_layer / pca_layer / gate_masks branches are only
    # active when explicitly initialized on the module; default forward skips
    # them, so they are not implemented here.
    print("KERNEL_OK")
</pallas_src>

<mosaic_0001>
module attributes {stable_mosaic.version = 11 : i64} {
  func.func @kernel(%arg0: i32, %arg1: memref<16x256xbf16, #tpu.memory_space<vmem>>, %arg2: memref<256x128xbf16, #tpu.memory_space<vmem>>, %arg3: memref<1x128xf32, #tpu.memory_space<vmem>>, %arg4: memref<1x128xf32, #tpu.memory_space<vmem>>, %arg5: memref<128x128xbf16, #tpu.memory_space<vmem>>, %arg6: memref<1x128xf32, #tpu.memory_space<vmem>>, %arg7: memref<128x128xbf16, #tpu.memory_space<vmem>>, %arg8: memref<1x128xf32, #tpu.memory_space<vmem>>, %arg9: memref<128x128xbf16, #tpu.memory_space<vmem>>, %arg10: memref<1x128xf32, #tpu.memory_space<vmem>>, %arg11: memref<16x128xf32, #tpu.memory_space<vmem>>) attributes {dimension_semantics = [#tpu.dimension_semantics<parallel>], iteration_bounds = array<i64: 1>, scalar_prefetch = 0 : i64, scratch_operands = 0 : i64, tpu.core_type = #tpu.core_type<tc>, window_params = [{transform_indices = @transform_0, window_bounds = array<i64: 16, 256>}, {pipeline_mode = #tpu.pipeline_mode<synchronous>, transform_indices = @transform_1, window_bounds = array<i64: 256, 128>}, {pipeline_mode = #tpu.pipeline_mode<synchronous>, transform_indices = @transform_2, window_bounds = array<i64: 1, 128>}, {pipeline_mode = #tpu.pipeline_mode<synchronous>, transform_indices = @transform_3, window_bounds = array<i64: 1, 128>}, {pipeline_mode = #tpu.pipeline_mode<synchronous>, transform_indices = @transform_4, window_bounds = array<i64: 128, 128>}, {pipeline_mode = #tpu.pipeline_mode<synchronous>, transform_indices = @transform_5, window_bounds = array<i64: 1, 128>}, {pipeline_mode = #tpu.pipeline_mode<synchronous>, transform_indices = @transform_6, window_bounds = array<i64: 128, 128>}, {pipeline_mode = #tpu.pipeline_mode<synchronous>, transform_indices = @transform_7, window_bounds = array<i64: 1, 128>}, {pipeline_mode = #tpu.pipeline_mode<synchronous>, transform_indices = @transform_8, window_bounds = array<i64: 128, 128>}, {pipeline_mode = #tpu.pipeline_mode<synchronous>, transform_indices = @transform_9, window_bounds = array<i64: 1, 128>}, {transform_indices = @transform_10, window_bounds = array<i64: 16, 128>}]} {
    %c0 = arith.constant 0 : index
    %c0_0 = arith.constant 0 : index
    %0 = vector.load %arg1[%c0, %c0_0] : memref<16x256xbf16, #tpu.memory_space<vmem>>, vector<16x256xbf16>
    %c0_1 = arith.constant 0 : index
    %c0_2 = arith.constant 0 : index
    %1 = vector.load %arg2[%c0_1, %c0_2] : memref<256x128xbf16, #tpu.memory_space<vmem>>, vector<256x128xbf16>
    %cst = arith.constant dense<0.000000e+00> : vector<16x128xf32>
    %2 = tpu.matmul %0, %1, %cst {dimension_numbers = #tpu.dot_dimension_numbers<[1], [0], [0], [1], [0, 0, 1, 1], [], []>} : vector<16x256xbf16>, vector<256x128xbf16>, vector<16x128xf32> -> vector<16x128xf32>
    %c0_3 = arith.constant 0 : index
    %c0_4 = arith.constant 0 : index
    %3 = vector.load %arg3[%c0_3, %c0_4] : memref<1x128xf32, #tpu.memory_space<vmem>>, vector<1x128xf32>
    %4 = vector.broadcast %3 : vector<1x128xf32> to vector<16x128xf32>
    %5 = arith.addf %2, %4 : vector<16x128xf32>
    %6 = arith.negf %5 : vector<16x128xf32>
    %7 = math.exp %6 : vector<16x128xf32>
    %cst_5 = arith.constant 1.000000e+00 : f32
    %8 = vector.broadcast %cst_5 : f32 to vector<16x128xf32>
    %9 = arith.addf %8, %7 : vector<16x128xf32>
    %10 = arith.divf %8, %9 : vector<16x128xf32>
    %c0_6 = arith.constant 0 : index
    %c0_7 = arith.constant 0 : index
    %11 = vector.load %arg4[%c0_6, %c0_7] : memref<1x128xf32, #tpu.memory_space<vmem>>, vector<1x128xf32>
    %12 = vector.broadcast %11 : vector<1x128xf32> to vector<16x128xf32>
    %13 = arith.mulf %12, %10 : vector<16x128xf32>
    %14 = arith.truncf %5 : vector<16x128xf32> to vector<16x128xbf16>
    %c0_8 = arith.constant 0 : index
    %c0_9 = arith.constant 0 : index
    %15 = vector.load %arg5[%c0_8, %c0_9] : memref<128x128xbf16, #tpu.memory_space<vmem>>, vector<128x128xbf16>
    %cst_10 = arith.constant dense<0.000000e+00> : vector<16x128xf32>
    %16 = tpu.matmul %14, %15, %cst_10 {dimension_numbers = #tpu.dot_dimension_numbers<[1], [0], [0], [1], [0, 0, 1, 1], [], []>} : vector<16x128xbf16>, vector<128x128xbf16>, vector<16x128xf32> -> vector<16x128xf32>
    %c0_11 = arith.constant 0 : index
    %c0_12 = arith.constant 0 : index
    %17 = vector.load %arg6[%c0_11, %c0_12] : memref<1x128xf32, #tpu.memory_space<vmem>>, vector<1x128xf32>
    %18 = vector.broadcast %17 : vector<1x128xf32> to vector<16x128xf32>
    %19 = arith.addf %16, %18 : vector<16x128xf32>
    %20 = arith.negf %19 : vector<16x128xf32>
    %21 = math.exp %20 : vector<16x128xf32>
    %cst_13 = arith.constant 1.000000e+00 : f32
    %22 = vector.broadcast %cst_13 : f32 to vector<16x128xf32>
    %23 = arith.addf %22, %21 : vector<16x128xf32>
    %24 = arith.divf %22, %23 : vector<16x128xf32>
    %25 = arith.truncf %13 : vector<16x128xf32> to vector<16x128xbf16>
    %c0_14 = arith.constant 0 : index
    %c0_15 = arith.constant 0 : index
    %26 = vector.load %arg7[%c0_14, %c0_15] : memref<128x128xbf16, #tpu.memory_space<vmem>>, vector<128x128xbf16>
    %cst_16 = arith.constant dense<0.000000e+00> : vector<16x128xf32>
    %27 = tpu.matmul %25, %26, %cst_16 {dimension_numbers = #tpu.dot_dimension_numbers<[1], [0], [0], [1], [0, 0, 1, 1], [], []>} : vector<16x128xbf16>, vector<128x128xbf16>, vector<16x128xf32> -> vector<16x128xf32>
    %c0_17 = arith.constant 0 : index
    %c0_18 = arith.constant 0 : index
    %28 = vector.load %arg8[%c0_17, %c0_18] : memref<1x128xf32, #tpu.memory_space<vmem>>, vector<1x128xf32>
    %29 = vector.broadcast %28 : vector<1x128xf32> to vector<16x128xf32>
    %30 = arith.addf %27, %29 : vector<16x128xf32>
    %31 = arith.mulf %30, %24 : vector<16x128xf32>
    %32 = arith.truncf %31 : vector<16x128xf32> to vector<16x128xbf16>
    %c0_19 = arith.constant 0 : index
    %c0_20 = arith.constant 0 : index
    %33 = vector.load %arg9[%c0_19, %c0_20] : memref<128x128xbf16, #tpu.memory_space<vmem>>, vector<128x128xbf16>
    %cst_21 = arith.constant dense<0.000000e+00> : vector<16x128xf32>
    %34 = tpu.matmul %32, %33, %cst_21 {dimension_numbers = #tpu.dot_dimension_numbers<[1], [0], [0], [1], [0, 0, 1, 1], [], []>} : vector<16x128xbf16>, vector<128x128xbf16>, vector<16x128xf32> -> vector<16x128xf32>
    %c0_22 = arith.constant 0 : index
    %c0_23 = arith.constant 0 : index
    %35 = vector.load %arg10[%c0_22, %c0_23] : memref<1x128xf32, #tpu.memory_space<vmem>>, vector<1x128xf32>
    %36 = vector.broadcast %35 : vector<1x128xf32> to vector<16x128xf32>
    %37 = arith.addf %34, %36 : vector<16x128xf32>
    %c0_24 = arith.constant 0 : index
    %c0_25 = arith.constant 0 : index
    %38 = vector.load %arg11[%c0_24, %c0_25] : memref<16x128xf32, #tpu.memory_space<vmem>>, vector<16x128xf32>
    tpu.vector_store %arg11[%c0_24, %c0_25], %37 {strides = array<i32>} : memref<16x128xf32, #tpu.memory_space<vmem>>, vector<16x128xf32>,
    return
  }
  func.func @transform_0(%arg0: i32) -> (i32, i32) {
    %c0_i32 = arith.constant 0 : i32
    %c0_i32_0 = arith.constant 0 : i32
    return %arg0, %c0_i32 : i32, i32
  }
  func.func @transform_1(%arg0: i32) -> (i32, i32) {
    %c0_i32 = arith.constant 0 : i32
    %c0_i32_0 = arith.constant 0 : i32
    %c0_i32_1 = arith.constant 0 : i32
    return %c0_i32, %c0_i32_0 : i32, i32
  }
  func.func @transform_2(%arg0: i32) -> (i32, i32) {
    %c0_i32 = arith.constant 0 : i32
    %c0_i32_0 = arith.constant 0 : i32
    %c0_i32_1 = arith.constant 0 : i32
    return %c0_i32, %c0_i32_0 : i32, i32
  }
  func.func @transform_3(%arg0: i32) -> (i32, i32) {
    %c0_i32 = arith.constant 0 : i32
    %c0_i32_0 = arith.constant 0 : i32
    %c0_i32_1 = arith.constant 0 : i32
    return %c0_i32, %c0_i32_0 : i32, i32
  }
  func.func @transform_4(%arg0: i32) -> (i32, i32) {
    %c0_i32 = arith.constant 0 : i32
    %c0_i32_0 = arith.constant 0 : i32
    %c0_i32_1 = arith.constant 0 : i32
    return %c0_i32, %c0_i32_0 : i32, i32
  }
  func.func @transform_5(%arg0: i32) -> (i32, i32) {
    %c0_i32 = arith.constant 0 : i32
    %c0_i32_0 = arith.constant 0 : i32
    %c0_i32_1 = arith.constant 0 : i32
    return %c0_i32, %c0_i32_0 : i32, i32
  }
  func.func @transform_6(%arg0: i32) -> (i32, i32) {
    %c0_i32 = arith.constant 0 : i32
    %c0_i32_0 = arith.constant 0 : i32
    %c0_i32_1 = arith.constant 0 : i32
    return %c0_i32, %c0_i32_0 : i32, i32
  }
  func.func @transform_7(%arg0: i32) -> (i32, i32) {
    %c0_i32 = arith.constant 0 : i32
    %c0_i32_0 = arith.constant 0 : i32
    %c0_i32_1 = arith.constant 0 : i32
    return %c0_i32, %c0_i32_0 : i32, i32
  }
  func.func @transform_8(%arg0: i32) -> (i32, i32) {
    %c0_i32 = arith.constant 0 : i32
    %c0_i32_0 = arith.constant 0 : i32
    %c0_i32_1 = arith.constant 0 : i32
    return %c0_i32, %c0_i32_0 : i32, i32
  }
  func.func @transform_9(%arg0: i32) -> (i32, i32) {
    %c0_i32 = arith.constant 0 : i32
    %c0_i32_0 = arith.constant 0 : i32
    %c0_i32_1 = arith.constant 0 : i32
    return %c0_i32, %c0_i32_0 : i32, i32
  }
  func.func @transform_10(%arg0: i32) -> (i32, i32) {
    %c0_i32 = arith.constant 0 : i32
    %c0_i32_0 = arith.constant 0 : i32
    return %arg0, %c0_i32 : i32, i32
  }
}

</mosaic_0001>

<llo_original>
// kernel: tpu_custom_call.1
$region0: #{tpu_custom_call.1}
  #allocation0 [shape = 'u32[]', space=smem, size = 0x4, offset = 0x4, fixed_abs, tag = 'smem constant byte address 0x4 - core index']
  #allocation1 [shape = 'u32[144,128]{1,0:T(1,128)}', space=vmem, size = 0x12000, scoped, tag = 'internal scratch']
  %s0 = inlined_call_operand.hbm [shape: bf16[16,256], index: 0, kind: input, shape index: {}]
  %s1 = inlined_call_operand.hbm [shape: bf16[256,128], index: 1, kind: input, shape index: {}]
  %s2 = inlined_call_operand.vmem [shape: f32[1,128], index: 2, kind: input, shape index: {}]
  %s3 = inlined_call_operand.vmem [shape: f32[1,128], index: 3, kind: input, shape index: {}]
  %s4 = inlined_call_operand.hbm [shape: bf16[128,128], index: 4, kind: input, shape index: {}]
  %s5 = inlined_call_operand.vmem [shape: f32[1,128], index: 5, kind: input, shape index: {}]
  %s6 = inlined_call_operand.hbm [shape: bf16[128,128], index: 6, kind: input, shape index: {}]
  %s7 = inlined_call_operand.vmem [shape: f32[1,128], index: 7, kind: input, shape index: {}]
  %s8 = inlined_call_operand.hbm [shape: bf16[128,128], index: 8, kind: input, shape index: {}]
  %s9 = inlined_call_operand.vmem [shape: f32[1,128], index: 9, kind: input, shape index: {}]
  %s10 = inlined_call_operand.hbm [shape: f32[16,128], index: 10, kind: output, shape index: {}]
  %s11 = sld [smem:[#allocation0]]
  $region70: #{tpu_custom_call.1} parent=0
    _
  %s13 = ssub.s32 1, %s11
  %s14 = scalar_select 0, %s13, %s11
  $region1: #{tpu_custom_call.1} parent=0
    #allocation2 [shape = 'u8[8192]{0}', space=vmem, size = 0x2000, scoped, tag = 'input window, operand 0, single buffered']
    #allocation3 [shape = 's32[1]{0}', space=sflag, size = 0x4, scoped, tag = 'scoped memory for tpu_custom_call.1']
    #allocation4 [shape = 's32[1]{0}', space=sflag, size = 0x4, scoped, tag = 'scoped memory for tpu_custom_call.1']
    #allocation5 [shape = 'u8[65536]{0}', space=vmem, size = 0x10000, scoped, tag = 'input window, operand 1, single buffered']
    #allocation6 [shape = 's32[1]{0}', space=sflag, size = 0x4, scoped, tag = 'scoped memory for tpu_custom_call.1']
    #allocation7 [shape = 'u8[32768]{0}', space=vmem, size = 0x8000, scoped, tag = 'input window, operand 4, single buffered']
    #allocation8 [shape = 'u8[32768]{0}', space=vmem, size = 0x8000, scoped, tag = 'input window, operand 6, single buffered']
    #allocation9 [shape = 's32[1]{0}', space=sflag, size = 0x4, scoped, tag = 'scoped memory for tpu_custom_call.1']
    #allocation10 [shape = 'u8[32768]{0}', space=vmem, size = 0x8000, scoped, tag = 'input window, operand 8, single buffered']
    #allocation11 [shape = 'u8[8192]{0}', space=vmem, size = 0x2000, scoped, tag = 'output window, operand 0, single buffered']
    %15 = vsyncpa [#allocation3], 0
    %16 = vsyncpa [#allocation6], 0
    %17 = vsyncpa [#allocation9], 0
    %18 = vsyncpa [#allocation4], 0
    // Predicated region
    $region2: #{tpu_custom_call.1} parent=1 // pred_check
      _
    $region3: #{tpu_custom_call.1} parent=1 // pred_check_branch
      %20 = sbr.rel (0) target = $region5
    $region4: #{tpu_custom_call.1} parent=1 // pred_region
      %s22 = ssub.s32 256, 256
      %23 = vsyncadd [#allocation3], %s22
      %s24 = sshll.u32 [#allocation2], 4
      %s25 = int_to_ptr.vmem [resolvable:$true] %s24
      %30 = dma.hbm_to_vmem [thread:$0]  %s0, 256, %s25, [#allocation3], 128, 128, 8
    $region5: #{tpu_custom_call.1} parent=1 // pred_fallthru
      _
    // Predicated region
    $region6: #{tpu_custom_call.1} parent=1 // pred_check
      _
    $region7: #{tpu_custom_call.1} parent=1 // pred_check_branch
      %32 = sbr.rel (0) target = $region9
    $region8: #{tpu_custom_call.1} parent=1 // pred_region
      %s34 = ssub.s32 2048, 2048
      %35 = vsyncadd [#allocation6], %s34
      %s36 = sshll.u32 [#allocation5], 4
      %s37 = int_to_ptr.vmem [resolvable:$true] %s36
      %42 = dma.hbm_to_vmem [thread:$0]  %s1, 2048, %s37, [#allocation6], 64, 64, 4
    $region9: #{tpu_custom_call.1} parent=1 // pred_fallthru
      _
    // Predicated region
    $region10: #{tpu_custom_call.1} parent=1 // pred_check
      _
    $region11: #{tpu_custom_call.1} parent=1 // pred_check_branch
      %44 = sbr.rel (0) target = $region13
    $region12: #{tpu_custom_call.1} parent=1 // pred_region
      _
    $region13: #{tpu_custom_call.1} parent=1 // pred_fallthru
      _
    // Predicated region
    $region14: #{tpu_custom_call.1} parent=1 // pred_check
      _
    $region15: #{tpu_custom_call.1} parent=1 // pred_check_branch
      %46 = sbr.rel (0) target = $region17
    $region16: #{tpu_custom_call.1} parent=1 // pred_region
      _
    $region17: #{tpu_custom_call.1} parent=1 // pred_fallthru
      _
    // Predicated region
    $region18: #{tpu_custom_call.1} parent=1 // pred_check
      _
    $region19: #{tpu_custom_call.1} parent=1 // pred_check_branch
      %48 = sbr.rel (0) target = $region21
    $region20: #{tpu_custom_call.1} parent=1 // pred_region
      %s50 = ssub.s32 1024, 1024
      %51 = vsyncadd [#allocation6], %s50
      %s52 = sshll.u32 [#allocation7], 4
      %s53 = int_to_ptr.vmem [resolvable:$true] %s52
      %58 = dma.hbm_to_vmem [thread:$0]  %s4, 1024, %s53, [#allocation6], 64, 64, 4
    $region21: #{tpu_custom_call.1} parent=1 // pred_fallthru
      _
    // Predicated region
    $region22: #{tpu_custom_call.1} parent=1 // pred_check
      _
    $region23: #{tpu_custom_call.1} parent=1 // pred_check_branch
      %60 = sbr.rel (0) target = $region25
    $region24: #{tpu_custom_call.1} parent=1 // pred_region
      _
    $region25: #{tpu_custom_call.1} parent=1 // pred_fallthru
      _
    // Predicated region
    $region26: #{tpu_custom_call.1} parent=1 // pred_check
      _
    $region27: #{tpu_custom_call.1} parent=1 // pred_check_branch
      %62 = sbr.rel (0) target = $region29
    $region28: #{tpu_custom_call.1} parent=1 // pred_region
      %s64 = ssub.s32 1024, 1024
      %65 = vsyncadd [#allocation9], %s64
      %s66 = sshll.u32 [#allocation8], 4
      %s67 = int_to_ptr.vmem [resolvable:$true] %s66
      %72 = dma.hbm_to_vmem [thread:$0]  %s6, 1024, %s67, [#allocation9], 64, 64, 4
    $region29: #{tpu_custom_call.1} parent=1 // pred_fallthru
      _
    // Predicated region
    $region30: #{tpu_custom_call.1} parent=1 // pred_check
      _
    $region31: #{tpu_custom_call.1} parent=1 // pred_check_branch
      %74 = sbr.rel (0) target = $region33
    $region32: #{tpu_custom_call.1} parent=1 // pred_region
      _
    $region33: #{tpu_custom_call.1} parent=1 // pred_fallthru
      _
    // Predicated region
    $region34: #{tpu_custom_call.1} parent=1 // pred_check
      _
    $region35: #{tpu_custom_call.1} parent=1 // pred_check_branch
      %76 = sbr.rel (0) target = $region37
    $region36: #{tpu_custom_call.1} parent=1 // pred_region
      %s78 = ssub.s32 1024, 1024
      %79 = vsyncadd [#allocation9], %s78
      %s80 = sshll.u32 [#allocation10], 4
      %s81 = int_to_ptr.vmem [resolvable:$true] %s80
      %86 = dma.hbm_to_vmem [thread:$0]  %s8, 1024, %s81, [#allocation9], 64, 64, 4
    $region37: #{tpu_custom_call.1} parent=1 // pred_fallthru
      _
    // Predicated region
    $region38: #{tpu_custom_call.1} parent=1 // pred_check
      _
    $region39: #{tpu_custom_call.1} parent=1 // pred_check_branch
      %88 = sbr.rel (0) target = $region41
    $region40: #{tpu_custom_call.1} parent=1 // pred_region
      _
    $region41: #{tpu_custom_call.1} parent=1 // pred_fallthru
      _
    // Predicated region
    $region42: #{tpu_custom_call.1} parent=1 // pred_check
      _
    $region43: #{tpu_custom_call.1} parent=1 // pred_check_branch
      %90 = sbr.rel (0) target = $region45
    $region44: #{tpu_custom_call.1} parent=1 // pred_region
      %91 = dma.done [#allocation3], 256
    $region45: #{tpu_custom_call.1} parent=1 // pred_fallthru
      _
    // Predicated region
    $region46: #{tpu_custom_call.1} parent=1 // pred_check
      _
    $region47: #{tpu_custom_call.1} parent=1 // pred_check_branch
      %93 = sbr.rel (0) target = $region49
    $region48: #{tpu_custom_call.1} parent=1 // pred_region
      %94 = dma.done [#allocation6], 2048
    $region49: #{tpu_custom_call.1} parent=1 // pred_fallthru
      _
    // Predicated region
    $region50: #{tpu_custom_call.1} parent=1 // pred_check
      _
    $region51: #{tpu_custom_call.1} parent=1 // pred_check_branch
      %96 = sbr.rel (0) target = $region53
    $region52: #{tpu_custom_call.1} parent=1 // pred_region
      %97 = dma.done [#allocation6], 1024
    $region53: #{tpu_custom_call.1} parent=1 // pred_fallthru
      _
    // Predicated region
    $region54: #{tpu_custom_call.1} parent=1 // pred_check
      _
    $region55: #{tpu_custom_call.1} parent=1 // pred_check_branch
      %99 = sbr.rel (0) target = $region57
    $region56: #{tpu_custom_call.1} parent=1 // pred_region
      %100 = dma.done [#allocation9], 1024
    $region57: #{tpu_custom_call.1} parent=1 // pred_fallthru
      _
    // Predicated region
    $region58: #{tpu_custom_call.1} parent=1 // pred_check
      _
    $region59: #{tpu_custom_call.1} parent=1 // pred_check_branch
      %102 = sbr.rel (0) target = $region61
    $region60: #{tpu_custom_call.1} parent=1 // pred_region
      %103 = dma.done [#allocation9], 1024
    $region61: #{tpu_custom_call.1} parent=1 // pred_fallthru
      _
    %v105 = vld [vmem:[#allocation2] sm:$0xff]
    %v106 = vld [vmem:[#allocation2 + $0x8] sm:$0xff]
    %v107 = vld [vmem:[#allocation5] sm:$0xf]
    %v108 = vld [vmem:[#allocation5 + $0x4] sm:$0xf]
    %v109 = vld [vmem:[#allocation5 + $0x8] sm:$0xf]
    %v110 = vld [vmem:[#allocation5 + $0xc] sm:$0xf]
    %v111 = vld [vmem:[#allocation5 + $0x10] sm:$0xf]
    %v112 = vld [vmem:[#allocation5 + $0x14] sm:$0xf]
    %v113 = vld [vmem:[#allocation5 + $0x18] sm:$0xf]
    %v114 = vld [vmem:[#allocation5 + $0x1c] sm:$0xf]
    %v115 = vld [vmem:[#allocation5 + $0x20] sm:$0xf]
    %v116 = vld [vmem:[#allocation5 + $0x24] sm:$0xf]
    %v117 = vld [vmem:[#allocation5 + $0x28] sm:$0xf]
    %v118 = vld [vmem:[#allocation5 + $0x2c] sm:$0xf]
    %v119 = vld [vmem:[#allocation5 + $0x30] sm:$0xf]
    %v120 = vld [vmem:[#allocation5 + $0x34] sm:$0xf]
    %v121 = vld [vmem:[#allocation5 + $0x38] sm:$0xf]
    %v122 = vld [vmem:[#allocation5 + $0x3c] sm:$0xf]
    %v123 = vld [vmem:[#allocation5 + $0x40] sm:$0xf]
    %v124 = vld [vmem:[#allocation5 + $0x44] sm:$0xf]
    %v125 = vld [vmem:[#allocation5 + $0x48] sm:$0xf]
    %v126 = vld [vmem:[#allocation5 + $0x4c] sm:$0xf]
    %v127 = vld [vmem:[#allocation5 + $0x50] sm:$0xf]
    %v128 = vld [vmem:[#allocation5 + $0x54] sm:$0xf]
    %v129 = vld [vmem:[#allocation5 + $0x58] sm:$0xf]
    %v130 = vld [vmem:[#allocation5 + $0x5c] sm:$0xf]
    %v131 = vld [vmem:[#allocation5 + $0x60] sm:$0xf]
    %v132 = vld [vmem:[#allocation5 + $0x64] sm:$0xf]
    %v133 = vld [vmem:[#allocation5 + $0x68] sm:$0xf]
    %v134 = vld [vmem:[#allocation5 + $0x6c] sm:$0xf]
    %v135 = vld [vmem:[#allocation5 + $0x70] sm:$0xf]
    %v136 = vld [vmem:[#allocation5 + $0x74] sm:$0xf]
    %v137 = vld [vmem:[#allocation5 + $0x78] sm:$0xf]
    %v138 = vld [vmem:[#allocation5 + $0x7c] sm:$0xf]
    %v139 = vld [vmem:[%s2] sm:$0x1]
    %v141 = vlaneseq
    %v142 = vshrl.u32 %v141, 7
    %v143 = vsub.s32 0, %v142
    %v144 = vrot.slane %v139, %v143
    %v148 = vunpack.c.l.b16 %v105
    %v149 = vunpack.c.h.b16 %v105
    %v150 = vunpack.c.l.b16 %v106
    %v151 = vunpack.c.h.b16 %v106
    %v152 = vpack.c.b16 %v150, %v148
    %v153 = vpack.c.b16 %v151, %v149
    %v188 = vunpack.c.l.b16 %v107
    %v189 = vunpack.c.l.b16 %v108
    %v190 = vunpack.c.l.b16 %v109
    %v191 = vunpack.c.l.b16 %v110
    %v192 = vunpack.c.l.b16 %v111
    %v193 = vunpack.c.l.b16 %v112
    %v194 = vunpack.c.l.b16 %v113
    %v195 = vunpack.c.l.b16 %v114
    %v196 = vunpack.c.l.b16 %v115
    %v197 = vunpack.c.l.b16 %v116
    %v198 = vunpack.c.l.b16 %v117
    %v199 = vunpack.c.l.b16 %v118
    %v200 = vunpack.c.l.b16 %v119
    %v201 = vunpack.c.l.b16 %v120
    %v202 = vunpack.c.l.b16 %v121
    %v203 = vunpack.c.l.b16 %v122
    %v204 = vunpack.c.l.b16 %v123
    %v205 = vunpack.c.l.b16 %v124
    %v206 = vunpack.c.l.b16 %v125
    %v207 = vunpack.c.l.b16 %v126
    %v208 = vunpack.c.l.b16 %v127
    %v209 = vunpack.c.l.b16 %v128
    %v210 = vunpack.c.l.b16 %v129
    %v211 = vunpack.c.l.b16 %v130
    %v212 = vunpack.c.l.b16 %v131
    %v213 = vunpack.c.l.b16 %v132
    %v214 = vunpack.c.l.b16 %v133
    %v215 = vunpack.c.l.b16 %v134
    %v216 = vunpack.c.l.b16 %v135
    %v217 = vunpack.c.l.b16 %v136
    %v218 = vunpack.c.l.b16 %v137
    %v219 = vunpack.c.l.b16 %v138
    %v220 = vpack.c.b16 %v189, %v188
    %v221 = vpack.c.b16 %v191, %v190
    %v222 = vpack.c.b16 %v193, %v192
    %v223 = vpack.c.b16 %v195, %v194
    %v224 = vpack.c.b16 %v197, %v196
    %v225 = vpack.c.b16 %v199, %v198
    %v226 = vpack.c.b16 %v201, %v200
    %v227 = vpack.c.b16 %v203, %v202
    %v228 = vpack.c.b16 %v205, %v204
    %v229 = vpack.c.b16 %v207, %v206
    %v230 = vpack.c.b16 %v209, %v208
    %v231 = vpack.c.b16 %v211, %v210
    %v232 = vpack.c.b16 %v213, %v212
    %v233 = vpack.c.b16 %v215, %v214
    %v234 = vpack.c.b16 %v217, %v216
    %v235 = vpack.c.b16 %v219, %v218
    %252 = vmatprep.subr.bf16.mxu0 0
    %253 = vmatpush1.bf16.msra.mxu0 %v220
    %254 = vmatprep.subr.bf16.mxu0 0
    %255 = vmatpush1.bf16.msra.mxu0 %v221
    %256 = vmatprep.subr.bf16.mxu0 0
    %257 = vmatpush1.bf16.msra.mxu0 %v222
    %258 = vmatprep.subr.bf16.mxu0 0
    %259 = vmatpush1.bf16.msra.mxu0 %v223
    %260 = vmatprep.subr.bf16.mxu0 0
    %261 = vmatpush1.bf16.msra.mxu0 %v224
    %262 = vmatprep.subr.bf16.mxu0 0
    %263 = vmatpush1.bf16.msra.mxu0 %v225
    %264 = vmatprep.subr.bf16.mxu0 0
    %265 = vmatpush1.bf16.msra.mxu0 %v226
    %266 = vmatprep.subr.bf16.mxu0 0
    %267 = vmatpush1.bf16.msra.mxu0 %v227
    %268 = vmatprep.subr.bf16.mxu0 0
    %269 = vmatpush1.bf16.msra.mxu0 %v228
    %270 = vmatprep.subr.bf16.mxu0 0
    %271 = vmatpush1.bf16.msra.mxu0 %v229
    %272 = vmatprep.subr.bf16.mxu0 0
    %273 = vmatpush1.bf16.msra.mxu0 %v230
    %274 = vmatprep.subr.bf16.mxu0 0
    %275 = vmatpush1.bf16.msra.mxu0 %v231
    %276 = vmatprep.subr.bf16.mxu0 0
    %277 = vmatpush1.bf16.msra.mxu0 %v232
    %278 = vmatprep.subr.bf16.mxu0 0
    %279 = vmatpush1.bf16.msra.mxu0 %v233
    %280 = vmatprep.subr.bf16.mxu0 0
    %281 = vmatpush1.bf16.msra.mxu0 %v234
    %282 = vmatprep.subr.bf16.mxu0 0
    %283 = vmatpush1.bf16.msra.mxu0 %v235
    %284 = vmatprep.mubr.bf16.mxu0 %v153
    %285 = vmatmul.mubr.bf16.gmra.mrb[0].mxu0 %v152
    %v286 = vpop.f32.mrb[0].mxu0
    %v287 = vadd.f32 %v144, %v286
    %v288 = vpop.f32.mrb[0].mxu0
    %v289 = vpop.f32.mrb[0].mxu0
    %v290 = vadd.f32 %v144, %v289
    %v291 = vpop.f32.mrb[0].mxu0
    %292 = vdwg.mxu0
    %v293 = vxor.u32 %v287, 2147483648
    %v294 = vxor.u32 %v290, 2147483648
    %v295 = vmul.f32 %v293, 1.442695
    %v296 = vpow.pop %v295
    %v297 = vmul.f32 %v294, 1.442695
    %v298 = vpow.pop %v297
    %v299 = vadd.f32 %v296, 1.0
    %v300 = vadd.f32 %v298, 1.0
    %v301 = vrcp.pop %v299
    %v302 = vmul.f32 1.0, %v301
    %v303 = vrcp.pop %v300
    %v304 = vmul.f32 1.0, %v303
    %v305 = vld [vmem:[%s3] sm:$0x1]
    %v307 = vlaneseq
    %v308 = vshrl.u32 %v307, 7
    %v309 = vsub.s32 0, %v308
    %v310 = vrot.slane %v305, %v309
    %v312 = vmul.f32 %v310, %v302
    %v313 = vmul.f32 %v310, %v304
    %v314 = vpack.c.bf16 %v290, %v287
    %v315 = vld [vmem:[#allocation7] sm:$0xf]
    %v316 = vld [vmem:[#allocation7 + $0x4] sm:$0xf]
    %v317 = vld [vmem:[#allocation7 + $0x8] sm:$0xf]
    %v318 = vld [vmem:[#allocation7 + $0xc] sm:$0xf]
    %v319 = vld [vmem:[#allocation7 + $0x10] sm:$0xf]
    %v320 = vld [vmem:[#allocation7 + $0x14] sm:$0xf]
    %v321 = vld [vmem:[#allocation7 + $0x18] sm:$0xf]
    %v322 = vld [vmem:[#allocation7 + $0x1c] sm:$0xf]
    %v323 = vld [vmem:[#allocation7 + $0x20] sm:$0xf]
    %v324 = vld [vmem:[#allocation7 + $0x24] sm:$0xf]
    %v325 = vld [vmem:[#allocation7 + $0x28] sm:$0xf]
    %v326 = vld [vmem:[#allocation7 + $0x2c] sm:$0xf]
    %v327 = vld [vmem:[#allocation7 + $0x30] sm:$0xf]
    %v328 = vld [vmem:[#allocation7 + $0x34] sm:$0xf]
    %v329 = vld [vmem:[#allocation7 + $0x38] sm:$0xf]
    %v330 = vld [vmem:[#allocation7 + $0x3c] sm:$0xf]
    %v331 = vld [vmem:[%s5] sm:$0x1]
    %v333 = vlaneseq
    %v334 = vshrl.u32 %v333, 7
    %v335 = vsub.s32 0, %v334
    %v336 = vrot.slane %v331, %v335
    %v354 = vunpack.c.l.b16 %v315
    %v355 = vunpack.c.l.b16 %v316
    %v356 = vunpack.c.l.b16 %v317
    %v357 = vunpack.c.l.b16 %v318
    %v358 = vunpack.c.l.b16 %v319
    %v359 = vunpack.c.l.b16 %v320
    %v360 = vunpack.c.l.b16 %v321
    %v361 = vunpack.c.l.b16 %v322
    %v362 = vunpack.c.l.b16 %v323
    %v363 = vunpack.c.l.b16 %v324
    %v364 = vunpack.c.l.b16 %v325
    %v365 = vunpack.c.l.b16 %v326
    %v366 = vunpack.c.l.b16 %v327
    %v367 = vunpack.c.l.b16 %v328
    %v368 = vunpack.c.l.b16 %v329
    %v369 = vunpack.c.l.b16 %v330
    %v370 = vpack.c.b16 %v355, %v354
    %v371 = vpack.c.b16 %v357, %v356
    %v372 = vpack.c.b16 %v359, %v358
    %v373 = vpack.c.b16 %v361, %v360
    %v374 = vpack.c.b16 %v363, %v362
    %v375 = vpack.c.b16 %v365, %v364
    %v376 = vpack.c.b16 %v367, %v366
    %v377 = vpack.c.b16 %v369, %v368
    %386 = vmatprep.subr.bf16.mxu0 0
    %387 = vmatpush1.bf16.msra.mxu0 %v370
    %388 = vmatprep.subr.bf16.mxu0 0
    %389 = vmatpush1.bf16.msra.mxu0 %v371
    %390 = vmatprep.subr.bf16.mxu0 0
    %391 = vmatpush1.bf16.msra.mxu0 %v372
    %392 = vmatprep.subr.bf16.mxu0 0
    %393 = vmatpush1.bf16.msra.mxu0 %v373
    %394 = vmatprep.subr.bf16.mxu0 0
    %395 = vmatpush1.bf16.msra.mxu0 %v374
    %396 = vmatprep.subr.bf16.mxu0 0
    %397 = vmatpush1.bf16.msra.mxu0 %v375
    %398 = vmatprep.subr.bf16.mxu0 0
    %399 = vmatpush1.bf16.msra.mxu0 %v376
    %400 = vmatprep.subr.bf16.mxu0 0
    %401 = vmatpush1.bf16.msra.mxu0 %v377
    %402 = vmatprep.subr.bf16.mxu0 0
    %403 = vmatpush1.bf16.msra.mxu0 0
    %404 = vmatprep.subr.bf16.mxu0 0
    %405 = vmatpush1.bf16.msra.mxu0 0
    %406 = vmatprep.subr.bf16.mxu0 0
    %407 = vmatpush1.bf16.msra.mxu0 0
    %408 = vmatprep.subr.bf16.mxu0 0
    %409 = vmatpush1.bf16.msra.mxu0 0
    %410 = vmatprep.subr.bf16.mxu0 0
    %411 = vmatpush1.bf16.msra.mxu0 0
    %412 = vmatprep.subr.bf16.mxu0 0
    %413 = vmatpush1.bf16.msra.mxu0 0
    %414 = vmatprep.subr.bf16.mxu0 0
    %415 = vmatpush1.bf16.msra.mxu0 0
    %416 = vmatprep.subr.bf16.mxu0 0
    %417 = vmatpush1.bf16.msra.mxu0 0
    %418 = vmatprep.mubr.bf16.mxu0 0
    %419 = vmatmul.mubr.bf16.gmra.mrb[0].mxu0 %v314
    %v420 = vpop.f32.mrb[0].mxu0
    %v421 = vadd.f32 %v336, %v420
    %v422 = vpop.f32.mrb[0].mxu0
    %v423 = vpop.f32.mrb[0].mxu0
    %v424 = vadd.f32 %v336, %v423
    %v425 = vpop.f32.mrb[0].mxu0
    %426 = vdwg.mxu0
    %v427 = vxor.u32 %v421, 2147483648
    %v428 = vxor.u32 %v424, 2147483648
    %v429 = vmul.f32 %v427, 1.442695
    %v430 = vpow.pop %v429
    %v431 = vmul.f32 %v428, 1.442695
    %v432 = vpow.pop %v431
    %v433 = vadd.f32 %v430, 1.0
    %v434 = vadd.f32 %v432, 1.0
    %v435 = vrcp.pop %v433
    %v436 = vmul.f32 1.0, %v435
    %v437 = vrcp.pop %v434
    %v438 = vmul.f32 1.0, %v437
    %v439 = vpack.c.bf16 %v313, %v312
    %v440 = vld [vmem:[#allocation8] sm:$0xf]
    %v441 = vld [vmem:[#allocation8 + $0x4] sm:$0xf]
    %v442 = vld [vmem:[#allocation8 + $0x8] sm:$0xf]
    %v443 = vld [vmem:[#allocation8 + $0xc] sm:$0xf]
    %v444 = vld [vmem:[#allocation8 + $0x10] sm:$0xf]
    %v445 = vld [vmem:[#allocation8 + $0x14] sm:$0xf]
    %v446 = vld [vmem:[#allocation8 + $0x18] sm:$0xf]
    %v447 = vld [vmem:[#allocation8 + $0x1c] sm:$0xf]
    %v448 = vld [vmem:[#allocation8 + $0x20] sm:$0xf]
    %v449 = vld [vmem:[#allocation8 + $0x24] sm:$0xf]
    %v450 = vld [vmem:[#allocation8 + $0x28] sm:$0xf]
    %v451 = vld [vmem:[#allocation8 + $0x2c] sm:$0xf]
    %v452 = vld [vmem:[#allocation8 + $0x30] sm:$0xf]
    %v453 = vld [vmem:[#allocation8 + $0x34] sm:$0xf]
    %v454 = vld [vmem:[#allocation8 + $0x38] sm:$0xf]
    %v455 = vld [vmem:[#allocation8 + $0x3c] sm:$0xf]
    %v456 = vld [vmem:[%s7] sm:$0x1]
    %v458 = vlaneseq
    %v459 = vshrl.u32 %v458, 7
    %v460 = vsub.s32 0, %v459
    %v461 = vrot.slane %v456, %v460
    %v479 = vunpack.c.l.b16 %v440
    %v480 = vunpack.c.l.b16 %v441
    %v481 = vunpack.c.l.b16 %v442
    %v482 = vunpack.c.l.b16 %v443
    %v483 = vunpack.c.l.b16 %v444
    %v484 = vunpack.c.l.b16 %v445
    %v485 = vunpack.c.l.b16 %v446
    %v486 = vunpack.c.l.b16 %v447
    %v487 = vunpack.c.l.b16 %v448
    %v488 = vunpack.c.l.b16 %v449
    %v489 = vunpack.c.l.b16 %v450
    %v490 = vunpack.c.l.b16 %v451
    %v491 = vunpack.c.l.b16 %v452
    %v492 = vunpack.c.l.b16 %v453
    %v493 = vunpack.c.l.b16 %v454
    %v494 = vunpack.c.l.b16 %v455
    %v495 = vpack.c.b16 %v480, %v479
    %v496 = vpack.c.b16 %v482, %v481
    %v497 = vpack.c.b16 %v484, %v483
    %v498 = vpack.c.b16 %v486, %v485
    %v499 = vpack.c.b16 %v488, %v487
    %v500 = vpack.c.b16 %v490, %v489
    %v501 = vpack.c.b16 %v492, %v491
    %v502 = vpack.c.b16 %v494, %v493
    %511 = vmatprep.subr.bf16.mxu0 0
    %512 = vmatpush1.bf16.msra.mxu0 %v495
    %513 = vmatprep.subr.bf16.mxu0 0
    %514 = vmatpush1.bf16.msra.mxu0 %v496
    %515 = vmatprep.subr.bf16.mxu0 0
    %516 = vmatpush1.bf16.msra.mxu0 %v497
    %517 = vmatprep.subr.bf16.mxu0 0
    %518 = vmatpush1.bf16.msra.mxu0 %v498
    %519 = vmatprep.subr.bf16.mxu0 0
    %520 = vmatpush1.bf16.msra.mxu0 %v499
    %521 = vmatprep.subr.bf16.mxu0 0
    %522 = vmatpush1.bf16.msra.mxu0 %v500
    %523 = vmatprep.subr.bf16.mxu0 0
    %524 = vmatpush1.bf16.msra.mxu0 %v501
    %525 = vmatprep.subr.bf16.mxu0 0
    %526 = vmatpush1.bf16.msra.mxu0 %v502
    %527 = vmatprep.subr.bf16.mxu0 0
    %528 = vmatpush1.bf16.msra.mxu0 0
    %529 = vmatprep.subr.bf16.mxu0 0
    %530 = vmatpush1.bf16.msra.mxu0 0
    %531 = vmatprep.subr.bf16.mxu0 0
    %532 = vmatpush1.bf16.msra.mxu0 0
    %533 = vmatprep.subr.bf16.mxu0 0
    %534 = vmatpush1.bf16.msra.mxu0 0
    %535 = vmatprep.subr.bf16.mxu0 0
    %536 = vmatpush1.bf16.msra.mxu0 0
    %537 = vmatprep.subr.bf16.mxu0 0
    %538 = vmatpush1.bf16.msra.mxu0 0
    %539 = vmatprep.subr.bf16.mxu0 0
    %540 = vmatpush1.bf16.msra.mxu0 0
    %541 = vmatprep.subr.bf16.mxu0 0
    %542 = vmatpush1.bf16.msra.mxu0 0
    %543 = vmatprep.mubr.bf16.mxu0 0
    %544 = vmatmul.mubr.bf16.gmra.mrb[0].mxu0 %v439
    %v545 = vpop.f32.mrb[0].mxu0
    %v546 = vadd.f32 %v461, %v545
    %v547 = vpop.f32.mrb[0].mxu0
    %v548 = vpop.f32.mrb[0].mxu0
    %v549 = vadd.f32 %v461, %v548
    %v550 = vpop.f32.mrb[0].mxu0
    %551 = vdwg.mxu0
    %v552 = vmul.f32 %v546, %v436
    %v553 = vmul.f32 %v549, %v438
    %v554 = vpack.c.bf16 %v553, %v552
    %v555 = vld [vmem:[#allocation10] sm:$0xf]
    %v556 = vld [vmem:[#allocation10 + $0x4] sm:$0xf]
    %v557 = vld [vmem:[#allocation10 + $0x8] sm:$0xf]
    %v558 = vld [vmem:[#allocation10 + $0xc] sm:$0xf]
    %v559 = vld [vmem:[#allocation10 + $0x10] sm:$0xf]
    %v560 = vld [vmem:[#allocation10 + $0x14] sm:$0xf]
    %v561 = vld [vmem:[#allocation10 + $0x18] sm:$0xf]
    %v562 = vld [vmem:[#allocation10 + $0x1c] sm:$0xf]
    %v563 = vld [vmem:[#allocation10 + $0x20] sm:$0xf]
    %v564 = vld [vmem:[#allocation10 + $0x24] sm:$0xf]
    %v565 = vld [vmem:[#allocation10 + $0x28] sm:$0xf]
    %v566 = vld [vmem:[#allocation10 + $0x2c] sm:$0xf]
    %v567 = vld [vmem:[#allocation10 + $0x30] sm:$0xf]
    %v568 = vld [vmem:[#allocation10 + $0x34] sm:$0xf]
    %v569 = vld [vmem:[#allocation10 + $0x38] sm:$0xf]
    %v570 = vld [vmem:[#allocation10 + $0x3c] sm:$0xf]
    %v571 = vld [vmem:[%s9] sm:$0x1]
    %v573 = vlaneseq
    %v574 = vshrl.u32 %v573, 7
    %v575 = vsub.s32 0, %v574
    %v576 = vrot.slane %v571, %v575
    %v594 = vunpack.c.l.b16 %v555
    %v595 = vunpack.c.l.b16 %v556
    %v596 = vunpack.c.l.b16 %v557
    %v597 = vunpack.c.l.b16 %v558
    %v598 = vunpack.c.l.b16 %v559
    %v599 = vunpack.c.l.b16 %v560
    %v600 = vunpack.c.l.b16 %v561
    %v601 = vunpack.c.l.b16 %v562
    %v602 = vunpack.c.l.b16 %v563
    %v603 = vunpack.c.l.b16 %v564
    %v604 = vunpack.c.l.b16 %v565
    %v605 = vunpack.c.l.b16 %v566
    %v606 = vunpack.c.l.b16 %v567
    %v607 = vunpack.c.l.b16 %v568
    %v608 = vunpack.c.l.b16 %v569
    %v609 = vunpack.c.l.b16 %v570
    %v610 = vpack.c.b16 %v595, %v594
    %v611 = vpack.c.b16 %v597, %v596
    %v612 = vpack.c.b16 %v599, %v598
    %v613 = vpack.c.b16 %v601, %v600
    %v614 = vpack.c.b16 %v603, %v602
    %v615 = vpack.c.b16 %v605, %v604
    %v616 = vpack.c.b16 %v607, %v606
    %v617 = vpack.c.b16 %v609, %v608
    %626 = vmatprep.subr.bf16.mxu0 0
    %627 = vmatpush1.bf16.msra.mxu0 %v610
    %628 = vmatprep.subr.bf16.mxu0 0
    %629 = vmatpush1.bf16.msra.mxu0 %v611
    %630 = vmatprep.subr.bf16.mxu0 0
    %631 = vmatpush1.bf16.msra.mxu0 %v612
    %632 = vmatprep.subr.bf16.mxu0 0
    %633 = vmatpush1.bf16.msra.mxu0 %v613
    %634 = vmatprep.subr.bf16.mxu0 0
    %635 = vmatpush1.bf16.msra.mxu0 %v614
    %636 = vmatprep.subr.bf16.mxu0 0
    %637 = vmatpush1.bf16.msra.mxu0 %v615
    %638 = vmatprep.subr.bf16.mxu0 0
    %639 = vmatpush1.bf16.msra.mxu0 %v616
    %640 = vmatprep.subr.bf16.mxu0 0
    %641 = vmatpush1.bf16.msra.mxu0 %v617
    %642 = vmatprep.subr.bf16.mxu0 0
    %643 = vmatpush1.bf16.msra.mxu0 0
    %644 = vmatprep.subr.bf16.mxu0 0
    %645 = vmatpush1.bf16.msra.mxu0 0
    %646 = vmatprep.subr.bf16.mxu0 0
    %647 = vmatpush1.bf16.msra.mxu0 0
    %648 = vmatprep.subr.bf16.mxu0 0
    %649 = vmatpush1.bf16.msra.mxu0 0
    %650 = vmatprep.subr.bf16.mxu0 0
    %651 = vmatpush1.bf16.msra.mxu0 0
    %652 = vmatprep.subr.bf16.mxu0 0
    %653 = vmatpush1.bf16.msra.mxu0 0
    %654 = vmatprep.subr.bf16.mxu0 0
    %655 = vmatpush1.bf16.msra.mxu0 0
    %656 = vmatprep.subr.bf16.mxu0 0
    %657 = vmatpush1.bf16.msra.mxu0 0
    %658 = vmatprep.mubr.bf16.mxu0 0
    %659 = vmatmul.mubr.bf16.gmra.mrb[0].mxu0 %v554
    %v660 = vpop.f32.mrb[0].mxu0
    %v661 = vadd.f32 %v576, %v660
    %v662 = vpop.f32.mrb[0].mxu0
    %v663 = vpop.f32.mrb[0].mxu0
    %v664 = vadd.f32 %v576, %v663
    %v665 = vpop.f32.mrb[0].mxu0
    %666 = vdwg.mxu0
    %667 = vst [vmem:[#allocation11] sm:$0xff] %v661
    %668 = vst [vmem:[#allocation11 + $0x8] sm:$0xff] %v664
    // Predicated region
    $region62: #{tpu_custom_call.1} parent=1 // pred_check
      _
    $region63: #{tpu_custom_call.1} parent=1 // pred_check_branch
      %670 = sbr.rel (0) target = $region65
    $region64: #{tpu_custom_call.1} parent=1 // pred_region
      %s672 = ssub.s32 256, 256
      %673 = vsyncadd [#allocation4], %s672
      %s674 = sshll.u32 [#allocation11], 4
      %s675 = int_to_ptr.vmem [resolvable:$true] %s674
      %680 = dma.vmem_to_hbm [thread:$0]  %s675, 256, %s10, [#allocation4], 128, 128, 8
    $region65: #{tpu_custom_call.1} parent=1 // pred_fallthru
      _
    // Predicated region
    $region66: #{tpu_custom_call.1} parent=1 // pred_check
      _
    $region67: #{tpu_custom_call.1} parent=1 // pred_check_branch
      %682 = sbr.rel (0) target = $region69
    $region68: #{tpu_custom_call.1} parent=1 // pred_region
      %683 = dma.done [#allocation4], 256
    $region69: #{tpu_custom_call.1} parent=1 // pred_fallthru
      _
    %684 = vsyncpa [#allocation3], 1
    %685 = vsyncpa [#allocation6], 1
    %686 = vsyncpa [#allocation9], 1
    %687 = vsyncpa [#allocation4], 1

</llo_original>
